<compile_context>
chip_gen: v7x
topology: tpu7x:2x2x1
jax: 0.10.0
libtpu: 0.0.40
codegen_flags: <defaults>
</compile_context>

<pallas_src>
import math

import jax
import jax.numpy as jnp
from jax.experimental import pallas as pl
from jax.experimental.pallas import tpu as pltpu


# ----------------------------- Pallas kernel --------------------------------

def _add_pe_kernel(x_ref, pe_ref, o_ref):
    # x_ref / o_ref: (seq_tile, d_model) block of one batch element (batch dim squeezed)
    # pe_ref:        (seq_tile, d_model) positional-encoding slab (shared across batch)
    o_ref[...] = x_ref[...] + pe_ref[...]


# ----------------------------- buffer construction ---------------------------

def make_positional_encoding(max_len, d_model, dtype=jnp.float32):
    """Replicates the PyTorch __init__ buffer: interleaved sin/cos table (max_len, d_model).

    Built once (register_buffer semantics) and stored pre-cast to the model dtype so
    the forward pass does no extra slice/cast pass over HBM.
    """
    position = jnp.arange(max_len, dtype=jnp.float32)[:, None]                 # (max_len, 1)
    div_term = jnp.exp(
        jnp.arange(0, d_model, 2, dtype=jnp.float32) * (-(math.log(10000.0) / d_model))
    )                                                                          # (ceil(d/2),)
    ang = position * div_term                                                  # (max_len, ceil(d/2))
    pe = jnp.zeros((max_len, d_model), jnp.float32)
    pe = pe.at[:, 0::2].set(jnp.sin(ang))
    pe = pe.at[:, 1::2].set(jnp.cos(ang[:, : d_model // 2]))                   # odd d_model safe
    return pe.astype(dtype)


# ----------------------------- tiling helpers ---------------------------------

def _sublane_multiple(dtype):
    """Minimum second-to-last-dim alignment per dtype (8 for 4B, 16 for 2B, 32 for 1B)."""
    return {4: 8, 2: 16, 1: 32}.get(jnp.dtype(dtype).itemsize, 8)


def _pick_seq_tile(L, D, dtype, vmem_budget_bytes):
    """Largest seq tile that keeps ~6 live blocks (x, pe, out double-buffered) in budget.

    Prefers tl == L (single tile, always layout-legal) and otherwise a sublane-aligned
    divisor of L so the last block is never ragged.
    """
    itemsize = jnp.dtype(dtype).itemsize
    sub = _sublane_multiple(dtype)
    max_tl = vmem_budget_bytes // (6 * D * itemsize)
    max_tl = max(sub, (max_tl // sub) * sub)
    if L <= max_tl:
        return L
    for cand in range(max_tl, sub - 1, -sub):      # largest aligned divisor of L
        if L % cand == 0:
            return cand
    return max_tl                                   # fallback: ragged last tile (masked)


# ----------------------------- forward wrapper -------------------------------

def positional_encoding_forward(x, pe, *, vmem_budget_bytes=24 << 20):
    """x: (B, L, D); pe: (max_len, D) precomputed buffer.  Returns x + pe[:L] (dropout p=0)."""
    B, L, D = x.shape
    max_len, d_pe = pe.shape
    assert d_pe == D, f"pe feature dim {d_pe} != x feature dim {D}"
    assert L <= max_len, f"sequence length {L} exceeds pe buffer max_len {max_len}"
    if pe.dtype != x.dtype:
        # Should not happen if pe was built with the model dtype; kept as a safety net.
        pe = pe.astype(x.dtype)

    itemsize = jnp.dtype(x.dtype).itemsize
    sub = _sublane_multiple(x.dtype)
    tl = _pick_seq_tile(L, D, x.dtype, vmem_budget_bytes)

    # Full pe buffer is passed directly; the index_map only touches the first
    # ceil(L/tl) blocks.  Only when tl == L and L is not sublane-aligned do we
    # slice so the (tl, D) block equals pe's full dims (layout-legality).
    pe_in = pe
    if tl == L and (L % sub != 0):
        pe_in = pe[:L]

    num_seq_tiles = pl.cdiv(L, tl)
    grid = (num_seq_tiles, B)                      # seq tiles outer, batch inner (pe reuse)

    cost = pl.CostEstimate(
        flops=B * L * D,
        transcendentals=0,
        bytes_accessed=(2 * B * L * D + num_seq_tiles * tl * D) * itemsize,
    )

    return pl.pallas_call(
        _add_pe_kernel,
        out_shape=jax.ShapeDtypeStruct((B, L, D), x.dtype),
        grid=grid,
        in_specs=[
            # batch dim squeezed out of the kernel view; (tl, D) lane-dense block
            pl.BlockSpec((None, tl, D), lambda l, b: (b, l, 0)),
            # pe block depends only on the seq-tile index -> reused across batch
            pl.BlockSpec((tl, D), lambda l, b: (l, 0)),
        ],
        out_specs=pl.BlockSpec((None, tl, D), lambda l, b: (b, l, 0)),
        compiler_params=pltpu.CompilerParams(
            dimension_semantics=("parallel", "parallel"),
            vmem_limit_bytes=32 << 20,
        ),
        cost_estimate=cost,
    )(x, pe_in)
    # TODO(synk): dropout with p>0 would need pltpu.prng_seed/prng_random_bits masking;
    # the module default (p=0) makes dropout the identity, which is what is implemented.


# ----------------------------- main ------------------------------------------

if __name__ == "__main__":
    B, L, D = 2, 256, 128          # (batch, seq, d_model) — d_model lane-dense (=128)
    MAX_LEN = 5000

    key = jax.random.PRNGKey(0)
    x = jax.random.normal(key, (B, L, D), jnp.float32)

    pe = make_positional_encoding(MAX_LEN, D, dtype=x.dtype)

    y = positional_encoding_forward(x, pe)
    jax.block_until_ready(y)

    # pure-JAX reference
    ref = x + pe[:L][None, :, :]
    assert y.shape == (B, L, D), y.shape
    max_err = jnp.max(jnp.abs(y - ref))
    assert bool(jnp.all(jnp.isfinite(y)))
    assert bool(max_err < 1e-6), float(max_err)

    print("KERNEL_OK")
</pallas_src>

<mosaic_0001>
module attributes {stable_mosaic.version = 11 : i64} {
  func.func @_add_pe_kernel(%arg0: i32, %arg1: i32, %arg2: memref<1x256x128xf32, #tpu.memory_space<vmem>>, %arg3: memref<256x128xf32, #tpu.memory_space<vmem>>, %arg4: memref<1x256x128xf32, #tpu.memory_space<vmem>>) attributes {dimension_semantics = [#tpu.dimension_semantics<parallel>, #tpu.dimension_semantics<parallel>], iteration_bounds = array<i64: 1, 2>, scalar_prefetch = 0 : i64, scratch_operands = 0 : i64, tpu.core_type = #tpu.core_type<tc>, window_params = [{transform_indices = @transform_0, window_bounds = array<i64: 1, 256, 128>}, {transform_indices = @transform_1, window_bounds = array<i64: 256, 128>}, {transform_indices = @transform_2, window_bounds = array<i64: 1, 256, 128>}]} {
    %c0 = arith.constant 0 : index
    %c0_0 = arith.constant 0 : index
    %c0_1 = arith.constant 0 : index
    %0 = vector.load %arg2[%c0, %c0_0, %c0_1] : memref<1x256x128xf32, #tpu.memory_space<vmem>>, vector<1x256x128xf32>
    %1 = vector.shape_cast %0 : vector<1x256x128xf32> to vector<256x128xf32>
    %c0_2 = arith.constant 0 : index
    %c0_3 = arith.constant 0 : index
    %2 = vector.load %arg3[%c0_2, %c0_3] : memref<256x128xf32, #tpu.memory_space<vmem>>, vector<256x128xf32>
    %3 = arith.addf %1, %2 : vector<256x128xf32>
    %c0_4 = arith.constant 0 : index
    %c0_5 = arith.constant 0 : index
    %c0_6 = arith.constant 0 : index
    %4 = vector.load %arg4[%c0_4, %c0_5, %c0_6] : memref<1x256x128xf32, #tpu.memory_space<vmem>>, vector<1x256x128xf32>
    %5 = vector.shape_cast %4 : vector<1x256x128xf32> to vector<256x128xf32>
    %6 = vector.shape_cast %3 : vector<256x128xf32> to vector<1x256x128xf32>
    tpu.vector_store %arg4[%c0_4, %c0_5, %c0_6], %6 {strides = array<i32>} : memref<1x256x128xf32, #tpu.memory_space<vmem>>, vector<1x256x128xf32>,
    return
  }
  func.func @transform_0(%arg0: i32, %arg1: i32) -> (i32, i32, i32) {
    %c0_i32 = arith.constant 0 : i32
    %c0_i32_0 = arith.constant 0 : i32
    return %arg1, %arg0, %c0_i32 : i32, i32, i32
  }
  func.func @transform_1(%arg0: i32, %arg1: i32) -> (i32, i32) {
    %c0_i32 = arith.constant 0 : i32
    %c0_i32_0 = arith.constant 0 : i32
    return %arg0, %c0_i32 : i32, i32
  }
  func.func @transform_2(%arg0: i32, %arg1: i32) -> (i32, i32, i32) {
    %c0_i32 = arith.constant 0 : i32
    %c0_i32_0 = arith.constant 0 : i32
    return %arg1, %arg0, %c0_i32 : i32, i32, i32
  }
}

</mosaic_0001>

<llo_original>
// kernel: tpu_custom_call.1
$region0: #{tpu_custom_call.1}
  #allocation0 [shape = 'u32[]', space=smem, size = 0x4, offset = 0x4, fixed_abs, tag = 'smem constant byte address 0x4 - core index']
  #allocation1 [shape = 'u32[144,128]{1,0:T(1,128)}', space=vmem, size = 0x12000, scoped, tag = 'internal scratch']
  %s0 = inlined_call_operand.hbm [shape: f32[2,256,128], index: 0, kind: input, shape index: {}]
  %s1 = inlined_call_operand.hbm [shape: f32[5000,128], index: 1, kind: input, shape index: {}]
  %s2 = inlined_call_operand.hbm [shape: f32[2,256,128], index: 2, kind: output, shape index: {}]
  %s3 = sld [smem:[#allocation0]]
  $region49: #{tpu_custom_call.1} parent=0
    _
  %s5 = ssub.s32 1, %s3
  %s6 = scalar_select 0, %s5, %s3
  $region1: #{tpu_custom_call.1} parent=0
    #allocation2 [shape = 'u8[262144]{0}', space=vmem, size = 0x40000, scoped, tag = 'input window, operand 0']
    #allocation3 [shape = 's32[2]{0}', space=sflag, size = 0x8, scoped, tag = 'scoped memory for tpu_custom_call.1']
    #allocation4 [shape = 's32[2]{0}', space=sflag, size = 0x8, scoped, tag = 'scoped memory for tpu_custom_call.1']
    #allocation5 [shape = 'u8[131072]{0}', space=vmem, size = 0x20000, scoped, tag = 'input window, operand 1, single buffered']
    #allocation6 [shape = 's32[1]{0}', space=sflag, size = 0x4, scoped, tag = 'scoped memory for tpu_custom_call.1']
    #allocation7 [shape = 'u8[262144]{0}', space=vmem, size = 0x40000, scoped, tag = 'output window, operand 0']
    %7 = vsyncpa [#allocation3], 0
    %s8 = scalar_lea.sflag [#allocation3], 1
    %9 = vsyncpa %s8, 0
    %10 = vsyncpa [#allocation6], 0
    %11 = vsyncpa [#allocation4], 0
    %s12 = scalar_lea.sflag [#allocation4], 1
    %13 = vsyncpa %s12, 0
    loop: start=0, step=1, limit=4
    $region2: #{tpu_custom_call.1} parent=1 // loop_pre_header
      _
    $region3: #{tpu_custom_call.1} parent=1 // loop_header
      %s15 = sphi 0, %s19
      %p16 = scmp.ge.s32.totalorder %s15, 4
      %s22 = sphi 0, %s34
      %s23 = sphi 0, %s30
      %s24 = sphi 0, %s22
      %s25 = sphi 0, %s23
      %s26 = sphi 0, %s24
      %s27 = sphi 0, %s25
      %s39 = sphi 0, %s41
      %s42 = sphi 0, %s39
      %s43 = sphi 0, %s42
      %s59 = sphi 0, %s43
      %s65 = sphi 0, %s67
      %s68 = sphi 0, %s65
      %s69 = sphi 0, %s68
      %s85 = sphi 0, %s69
      %s93 = sphi 0, %s95
      %s96 = sphi 0, %s93
      %s97 = sphi 0, %s96
      %s113 = sphi 0, %s97
    $region4: #{tpu_custom_call.1} parent=1 // loop_header_branch
      %18 = sbr.rel (%p16) target = $region8
    $region5: #{tpu_custom_call.1} parent=1 // loop_body
      %s20 = ssub.s32 %s15, 1
      %s21 = ssub.s32 %s15, 2
      %s28 = sadd.s32 1, %s23
      %p29 = scmp.ge.s32.totalorder %s28, 2
      %s30 = scalar_select %p29, 0, %s28
      %s31 = sadd.s32 1, %s22
      %s32 = scalar_select %p29, %s31, %s22
      %p33 = scmp.ge.s32.totalorder %s32, 1
      %s34 = scalar_select %p33, 0, %s32
      %s35 = ssub.s32 %s23, %s30
      %s36 = ssub.s32 %s22, %s34
      %s37 = sor.u32 %s35, %s36
      %p38 = scmp.eq.s32.totalorder %s37, 0
      %s40 = sadd.s32 %s39, 1
      %s41 = scalar_select %p38, %s39, %s40
      %p44 = pneg %p38
      %p45 = scmp.eq.s32.totalorder %s15, 1
      %p46 = por %p44, %p45
      %p47 = scmp.ne.s32.totalorder %s39, %s42
      %p48 = scmp.eq.s32.totalorder %s15, 0
      %p49 = por %p47, %p48
      %p50 = scmp.ne.s32.totalorder %s39, %s42
      %p51 = scmp.eq.s32.totalorder %s20, 1
      %p52 = por %p50, %p51
      %p53 = scmp.ne.s32.totalorder %s42, %s43
      %p54 = scmp.eq.s32.totalorder %s20, 0
      %p55 = por %p53, %p54
      %p56 = scmp.ne.s32.totalorder %s42, %s43
      %p57 = scmp.eq.s32.totalorder %s21, 1
      %p58 = por %p56, %p57
      %p60 = scmp.ne.s32.totalorder %s43, %s59
      %p61 = scmp.eq.s32.totalorder %s21, 0
      %p62 = por %p60, %p61
      %s63 = ssub.s32 %s22, %s34
      %p64 = scmp.eq.s32.totalorder %s63, 0
      %s66 = sadd.s32 %s65, 1
      %s67 = scalar_select %p64, %s65, %s66
      %p70 = pneg %p64
      %p71 = scmp.eq.s32.totalorder %s15, 1
      %p72 = por %p70, %p71
      %p73 = scmp.ne.s32.totalorder %s65, %s68
      %p74 = scmp.eq.s32.totalorder %s15, 0
      %p75 = por %p73, %p74
      %p76 = scmp.ne.s32.totalorder %s65, %s68
      %p77 = scmp.eq.s32.totalorder %s20, 1
      %p78 = por %p76, %p77
      %p79 = scmp.ne.s32.totalorder %s68, %s69
      %p80 = scmp.eq.s32.totalorder %s20, 0
      %p81 = por %p79, %p80
      %p82 = scmp.ne.s32.totalorder %s68, %s69
      %p83 = scmp.eq.s32.totalorder %s21, 1
      %p84 = por %p82, %p83
      %p86 = scmp.ne.s32.totalorder %s69, %s85
      %p87 = scmp.eq.s32.totalorder %s21, 0
      %p88 = por %p86, %p87
      %s89 = ssub.s32 %s23, %s30
      %s90 = ssub.s32 %s22, %s34
      %s91 = sor.u32 %s89, %s90
      %p92 = scmp.eq.s32.totalorder %s91, 0
      %s94 = sadd.s32 %s93, 1
      %s95 = scalar_select %p92, %s93, %s94
      %p98 = pneg %p92
      %p99 = scmp.eq.s32.totalorder %s15, 1
      %p100 = por %p98, %p99
      %p101 = scmp.ne.s32.totalorder %s93, %s96
      %p102 = scmp.eq.s32.totalorder %s15, 0
      %p103 = por %p101, %p102
      %p104 = scmp.ne.s32.totalorder %s93, %s96
      %p105 = scmp.eq.s32.totalorder %s20, 1
      %p106 = por %p104, %p105
      %p107 = scmp.ne.s32.totalorder %s96, %s97
      %p108 = scmp.eq.s32.totalorder %s20, 0
      %p109 = por %p107, %p108
      %p110 = scmp.ne.s32.totalorder %s96, %s97
      %p111 = scmp.eq.s32.totalorder %s21, 1
      %p112 = por %p110, %p111
      %p114 = scmp.ne.s32.totalorder %s97, %s113
      %p115 = scmp.eq.s32.totalorder %s21, 0
      %p116 = por %p114, %p115
      %p117 = scmp.le.s32.totalorder 1, %s15
      %p118 = scmp.lt.s32.totalorder %s15, 3
      %p119 = pnand %p117, %p118
      %p120 = pneg %p119
      // Predicated region
      $region9: #{tpu_custom_call.1} parent=5 // pred_check
        _
      $region10: #{tpu_custom_call.1} parent=5 // pred_check_branch
        %122 = sbr.rel (%p119) target = $region12
      $region11: #{tpu_custom_call.1} parent=5 // pred_region
        %s123 = ssub.s32 %s15, 1
        // Predicated region
        $region13: #{tpu_custom_call.1} parent=11 // pred_check
          %p124 = pneg %p81
        $region14: #{tpu_custom_call.1} parent=11 // pred_check_branch
          %126 = sbr.rel (%p124) target = $region16
        $region15: #{tpu_custom_call.1} parent=11 // pred_region
          %s127 = smul.u32 32, %s24
          %s128 = ssub.s32 625, %s127
          %p129 = scmp.lt.s32.totalorder %s128, 32
          %s130 = scalar_select %p129, %s128, 32
          %s131 = smul.u32 128, %s130
          %s133 = ssub.s32 4096, %s131
          %134 = vsyncadd [#allocation6], %s133
          %p135 = scmp.ne.s32.totalorder 0, %s131
          %s136 = smul.addr %s127, 128
          %s137 = scalar_lea.hbm %s1, %s136
          %s138 = smul.u32 8, %s130
          %s139 = sshll.u32 [#allocation5], 4
          %s140 = int_to_ptr.vmem [resolvable:$true] %s139
          %s141 = sshll.u32 %s138, 4
          %145 = dma.hbm_to_vmem [thread:$0]  (%p135), %s137, %s141, %s140, [#allocation6], 128, 128, 8
        $region16: #{tpu_custom_call.1} parent=11 // pred_fallthru
          _
      $region12: #{tpu_custom_call.1} parent=5 // pred_fallthru
        _
      %p146 = scmp.lt.s32.totalorder %s15, 2
      // Predicated region
      $region17: #{tpu_custom_call.1} parent=5 // pred_check
        %p147 = pneg %p146
      $region18: #{tpu_custom_call.1} parent=5 // pred_check_branch
        %149 = sbr.rel (%p147) target = $region20
      $region19: #{tpu_custom_call.1} parent=5 // pred_region
        // Predicated region
        $region21: #{tpu_custom_call.1} parent=19 // pred_check
          %p150 = pneg %p49
        $region22: #{tpu_custom_call.1} parent=19 // pred_check_branch
          %152 = sbr.rel (%p150) target = $region24
        $region23: #{tpu_custom_call.1} parent=19 // pred_region
          %s153 = sand.u32 %s39, 1
          %s154 = scalar_lea.sflag [#allocation3], %s153
          %s155 = sand.u32 %s39, 1
          %s156 = smul.addr %s155, 256
          %s157 = scalar_lea.vmem [#allocation2], %s156
          %s158 = smul.u32 32, %s22
          %s160 = ssub.s32 4096, 4096
          %161 = vsyncadd %s154, %s160
          %s162 = smul.addr %s23, 32
          %s163 = sadd.s32 %s158, %s162
          %s164 = smul.addr %s163, 128
          %s165 = scalar_lea.hbm %s0, %s164
          %s166 = sshll.u32 %s157, 4
          %s167 = int_to_ptr.vmem [resolvable:$true] %s166
          %172 = dma.hbm_to_vmem [thread:$0]  %s165, 4096, %s167, %s154, 128, 128, 8
        $region24: #{tpu_custom_call.1} parent=19 // pred_fallthru
          _
      $region20: #{tpu_custom_call.1} parent=5 // pred_fallthru
        _
      %p173 = scmp.le.s32.totalorder 1, %s15
      %p174 = scmp.lt.s32.totalorder %s15, 3
      %p175 = pnand %p173, %p174
      %p176 = pneg %p175
      // Predicated region
      $region25: #{tpu_custom_call.1} parent=5 // pred_check
        _
      $region26: #{tpu_custom_call.1} parent=5 // pred_check_branch
        %178 = sbr.rel (%p175) target = $region28
      $region27: #{tpu_custom_call.1} parent=5 // pred_region
        %s179 = ssub.s32 %s15, 1
        %s180 = sand.u32 %s42, 1
        %s181 = scalar_lea.sflag [#allocation3], %s180
        %s182 = sand.u32 %s42, 1
        %s183 = smul.addr %s182, 256
        %s184 = scalar_lea.vmem [#allocation2], %s183
        // Predicated region
        $region29: #{tpu_custom_call.1} parent=27 // pred_check
          %p185 = pneg %p55
        $region30: #{tpu_custom_call.1} parent=27 // pred_check_branch
          %187 = sbr.rel (%p185) target = $region32
        $region31: #{tpu_custom_call.1} parent=27 // pred_region
          %188 = dma.done %s181, 4096
        $region32: #{tpu_custom_call.1} parent=27 // pred_fallthru
          _
        // Predicated region
        $region33: #{tpu_custom_call.1} parent=27 // pred_check
          %p189 = pneg %p81
        $region34: #{tpu_custom_call.1} parent=27 // pred_check_branch
          %191 = sbr.rel (%p189) target = $region36
        $region35: #{tpu_custom_call.1} parent=27 // pred_region
          %192 = dma.done [#allocation6], 4096
        $region36: #{tpu_custom_call.1} parent=27 // pred_fallthru
          _
        %s193 = sand.u32 %s42, 1
        %s194 = scalar_lea.sflag [#allocation3], %s193
        %s195 = sand.u32 %s42, 1
        %s196 = smul.addr %s195, 256
        %s197 = scalar_lea.vmem [#allocation2], %s196
        %p198 = pneg %p55
        %p199 = pneg %p52
        %p200 = pneg %p81
        %p201 = pneg %p78
        %p202 = pneg %p109
        %p203 = pneg %p106
        %s204 = sand.u32 %s96, 1
        %s205 = scalar_lea.sflag [#allocation4], %s204
        %s206 = sand.u32 %s96, 1
        %s207 = smul.addr %s206, 256
        %s208 = scalar_lea.vmem [#allocation7], %s207
        %s209 = smul.u32 32, %s24
        %s210 = smul.u32 32, %s24
        %s211 = ssub.s32 625, %s210
        %p212 = scmp.lt.s32.totalorder %s211, 32
        %s213 = scalar_select %p212, %s211, 32
        %s214 = smul.u32 128, %s213
        %s215 = smul.u32 32, %s24
        %v216 = vld [vmem:[%s184] sm:$0xff]
        %v217 = vld [vmem:[%s184 + $0x8] sm:$0xff]
        %v218 = vld [vmem:[%s184 + $0x10] sm:$0xff]
        %v219 = vld [vmem:[%s184 + $0x18] sm:$0xff]
        %v220 = vld [vmem:[%s184 + $0x20] sm:$0xff]
        %v221 = vld [vmem:[%s184 + $0x28] sm:$0xff]
        %v222 = vld [vmem:[%s184 + $0x30] sm:$0xff]
        %v223 = vld [vmem:[%s184 + $0x38] sm:$0xff]
        %v224 = vld [vmem:[%s184 + $0x40] sm:$0xff]
        %v225 = vld [vmem:[%s184 + $0x48] sm:$0xff]
        %v226 = vld [vmem:[%s184 + $0x50] sm:$0xff]
        %v227 = vld [vmem:[%s184 + $0x58] sm:$0xff]
        %v228 = vld [vmem:[%s184 + $0x60] sm:$0xff]
        %v229 = vld [vmem:[%s184 + $0x68] sm:$0xff]
        %v230 = vld [vmem:[%s184 + $0x70] sm:$0xff]
        %v231 = vld [vmem:[%s184 + $0x78] sm:$0xff]
        %v232 = vld [vmem:[%s184 + $0x80] sm:$0xff]
        %v233 = vld [vmem:[%s184 + $0x88] sm:$0xff]
        %v234 = vld [vmem:[%s184 + $0x90] sm:$0xff]
        %v235 = vld [vmem:[%s184 + $0x98] sm:$0xff]
        %v236 = vld [vmem:[%s184 + $0xa0] sm:$0xff]
        %v237 = vld [vmem:[%s184 + $0xa8] sm:$0xff]
        %v238 = vld [vmem:[%s184 + $0xb0] sm:$0xff]
        %v239 = vld [vmem:[%s184 + $0xb8] sm:$0xff]
        %v240 = vld [vmem:[%s184 + $0xc0] sm:$0xff]
        %v241 = vld [vmem:[%s184 + $0xc8] sm:$0xff]
        %v242 = vld [vmem:[%s184 + $0xd0] sm:$0xff]
        %v243 = vld [vmem:[%s184 + $0xd8] sm:$0xff]
        %v244 = vld [vmem:[%s184 + $0xe0] sm:$0xff]
        %v245 = vld [vmem:[%s184 + $0xe8] sm:$0xff]
        %v246 = vld [vmem:[%s184 + $0xf0] sm:$0xff]
        %v247 = vld [vmem:[%s184 + $0xf8] sm:$0xff]
        %v248 = vld [vmem:[#allocation5] sm:$0xff]
        %v249 = vld [vmem:[#allocation5 + $0x8] sm:$0xff]
        %v250 = vld [vmem:[#allocation5 + $0x10] sm:$0xff]
        %v251 = vld [vmem:[#allocation5 + $0x18] sm:$0xff]
        %v252 = vld [vmem:[#allocation5 + $0x20] sm:$0xff]
        %v253 = vld [vmem:[#allocation5 + $0x28] sm:$0xff]
        %v254 = vld [vmem:[#allocation5 + $0x30] sm:$0xff]
        %v255 = vld [vmem:[#allocation5 + $0x38] sm:$0xff]
        %v256 = vld [vmem:[#allocation5 + $0x40] sm:$0xff]
        %v257 = vld [vmem:[#allocation5 + $0x48] sm:$0xff]
        %v258 = vld [vmem:[#allocation5 + $0x50] sm:$0xff]
        %v259 = vld [vmem:[#allocation5 + $0x58] sm:$0xff]
        %v260 = vld [vmem:[#allocation5 + $0x60] sm:$0xff]
        %v261 = vld [vmem:[#allocation5 + $0x68] sm:$0xff]
        %v262 = vld [vmem:[#allocation5 + $0x70] sm:$0xff]
        %v263 = vld [vmem:[#allocation5 + $0x78] sm:$0xff]
        %v264 = vld [vmem:[#allocation5 + $0x80] sm:$0xff]
        %v265 = vld [vmem:[#allocation5 + $0x88] sm:$0xff]
        %v266 = vld [vmem:[#allocation5 + $0x90] sm:$0xff]
        %v267 = vld [vmem:[#allocation5 + $0x98] sm:$0xff]
        %v268 = vld [vmem:[#allocation5 + $0xa0] sm:$0xff]
        %v269 = vld [vmem:[#allocation5 + $0xa8] sm:$0xff]
        %v270 = vld [vmem:[#allocation5 + $0xb0] sm:$0xff]
        %v271 = vld [vmem:[#allocation5 + $0xb8] sm:$0xff]
        %v272 = vld [vmem:[#allocation5 + $0xc0] sm:$0xff]
        %v273 = vld [vmem:[#allocation5 + $0xc8] sm:$0xff]
        %v274 = vld [vmem:[#allocation5 + $0xd0] sm:$0xff]
        %v275 = vld [vmem:[#allocation5 + $0xd8] sm:$0xff]
        %v276 = vld [vmem:[#allocation5 + $0xe0] sm:$0xff]
        %v277 = vld [vmem:[#allocation5 + $0xe8] sm:$0xff]
        %v278 = vld [vmem:[#allocation5 + $0xf0] sm:$0xff]
        %v279 = vld [vmem:[#allocation5 + $0xf8] sm:$0xff]
        %v280 = vadd.f32 %v216, %v248
        %v281 = vadd.f32 %v217, %v249
        %v282 = vadd.f32 %v218, %v250
        %v283 = vadd.f32 %v219, %v251
        %v284 = vadd.f32 %v220, %v252
        %v285 = vadd.f32 %v221, %v253
        %v286 = vadd.f32 %v222, %v254
        %v287 = vadd.f32 %v223, %v255
        %v288 = vadd.f32 %v224, %v256
        %v289 = vadd.f32 %v225, %v257
        %v290 = vadd.f32 %v226, %v258
        %v291 = vadd.f32 %v227, %v259
        %v292 = vadd.f32 %v228, %v260
        %v293 = vadd.f32 %v229, %v261
        %v294 = vadd.f32 %v230, %v262
        %v295 = vadd.f32 %v231, %v263
        %v296 = vadd.f32 %v232, %v264
        %v297 = vadd.f32 %v233, %v265
        %v298 = vadd.f32 %v234, %v266
        %v299 = vadd.f32 %v235, %v267
        %v300 = vadd.f32 %v236, %v268
        %v301 = vadd.f32 %v237, %v269
        %v302 = vadd.f32 %v238, %v270
        %v303 = vadd.f32 %v239, %v271
        %v304 = vadd.f32 %v240, %v272
        %v305 = vadd.f32 %v241, %v273
        %v306 = vadd.f32 %v242, %v274
        %v307 = vadd.f32 %v243, %v275
        %v308 = vadd.f32 %v244, %v276
        %v309 = vadd.f32 %v245, %v277
        %v310 = vadd.f32 %v246, %v278
        %v311 = vadd.f32 %v247, %v279
        %312 = vst [vmem:[%s208] sm:$0xff] %v280
        %313 = vst [vmem:[%s208 + $0x8] sm:$0xff] %v281
        %314 = vst [vmem:[%s208 + $0x10] sm:$0xff] %v282
        %315 = vst [vmem:[%s208 + $0x18] sm:$0xff] %v283
        %316 = vst [vmem:[%s208 + $0x20] sm:$0xff] %v284
        %317 = vst [vmem:[%s208 + $0x28] sm:$0xff] %v285
        %318 = vst [vmem:[%s208 + $0x30] sm:$0xff] %v286
        %319 = vst [vmem:[%s208 + $0x38] sm:$0xff] %v287
        %320 = vst [vmem:[%s208 + $0x40] sm:$0xff] %v288
        %321 = vst [vmem:[%s208 + $0x48] sm:$0xff] %v289
        %322 = vst [vmem:[%s208 + $0x50] sm:$0xff] %v290
        %323 = vst [vmem:[%s208 + $0x58] sm:$0xff] %v291
        %324 = vst [vmem:[%s208 + $0x60] sm:$0xff] %v292
        %325 = vst [vmem:[%s208 + $0x68] sm:$0xff] %v293
        %326 = vst [vmem:[%s208 + $0x70] sm:$0xff] %v294
        %327 = vst [vmem:[%s208 + $0x78] sm:$0xff] %v295
        %328 = vst [vmem:[%s208 + $0x80] sm:$0xff] %v296
        %329 = vst [vmem:[%s208 + $0x88] sm:$0xff] %v297
        %330 = vst [vmem:[%s208 + $0x90] sm:$0xff] %v298
        %331 = vst [vmem:[%s208 + $0x98] sm:$0xff] %v299
        %332 = vst [vmem:[%s208 + $0xa0] sm:$0xff] %v300
        %333 = vst [vmem:[%s208 + $0xa8] sm:$0xff] %v301
        %334 = vst [vmem:[%s208 + $0xb0] sm:$0xff] %v302
        %335 = vst [vmem:[%s208 + $0xb8] sm:$0xff] %v303
        %336 = vst [vmem:[%s208 + $0xc0] sm:$0xff] %v304
        %337 = vst [vmem:[%s208 + $0xc8] sm:$0xff] %v305
        %338 = vst [vmem:[%s208 + $0xd0] sm:$0xff] %v306
        %339 = vst [vmem:[%s208 + $0xd8] sm:$0xff] %v307
        %340 = vst [vmem:[%s208 + $0xe0] sm:$0xff] %v308
        %341 = vst [vmem:[%s208 + $0xe8] sm:$0xff] %v309
        %342 = vst [vmem:[%s208 + $0xf0] sm:$0xff] %v310
        %343 = vst [vmem:[%s208 + $0xf8] sm:$0xff] %v311
        %s344 = sand.u32 %s96, 1
        %s345 = scalar_lea.sflag [#allocation4], %s344
        %s346 = sand.u32 %s96, 1
        %s347 = smul.addr %s346, 256
        %s348 = scalar_lea.vmem [#allocation7], %s347
        // Predicated region
        $region37: #{tpu_custom_call.1} parent=27 // pred_check
          %p349 = pneg %p106
        $region38: #{tpu_custom_call.1} parent=27 // pred_check_branch
          %351 = sbr.rel (%p349) target = $region40
        $region39: #{tpu_custom_call.1} parent=27 // pred_region
          %s352 = smul.u32 32, %s24
          %s354 = ssub.s32 4096, 4096
          %355 = vsyncadd %s345, %s354
          %s356 = smul.addr %s25, 32
          %s357 = sadd.s32 %s352, %s356
          %s358 = smul.addr %s357, 128
          %s359 = scalar_lea.hbm %s2, %s358
          %s360 = sshll.u32 %s348, 4
          %s361 = int_to_ptr.vmem [resolvable:$true] %s360
          %366 = dma.vmem_to_hbm [thread:$0]  %s361, 4096, %s359, %s345, 128, 128, 8
        $region40: #{tpu_custom_call.1} parent=27 // pred_fallthru
          _
      $region28: #{tpu_custom_call.1} parent=5 // pred_fallthru
        _
      %p367 = scmp.le.s32.totalorder 2, %s15
      // Predicated region
      $region41: #{tpu_custom_call.1} parent=5 // pred_check
        %p368 = pneg %p367
      $region42: #{tpu_custom_call.1} parent=5 // pred_check_branch
        %370 = sbr.rel (%p368) target = $region44
      $region43: #{tpu_custom_call.1} parent=5 // pred_region
        %s371 = ssub.s32 %s15, 2
        // Predicated region
        $region45: #{tpu_custom_call.1} parent=43 // pred_check
          %p372 = pneg %p112
        $region46: #{tpu_custom_call.1} parent=43 // pred_check_branch
          %374 = sbr.rel (%p372) target = $region48
        $region47: #{tpu_custom_call.1} parent=43 // pred_region
          %s375 = sand.u32 %s97, 1
          %s376 = scalar_lea.sflag [#allocation4], %s375
          %s377 = sand.u32 %s97, 1
          %s378 = smul.addr %s377, 256
          %s379 = scalar_lea.vmem [#allocation7], %s378
          %380 = dma.done %s376, 4096
        $region48: #{tpu_custom_call.1} parent=43 // pred_fallthru
          _
      $region44: #{tpu_custom_call.1} parent=5 // pred_fallthru
        _
    $region6: #{tpu_custom_call.1} parent=1 // loop_footer
      %s19 = sadd.s32 1, %s15
    $region7: #{tpu_custom_call.1} parent=1 // loop_footer_branch
      %14 = sbr.rel target = $region3
    $region8: #{tpu_custom_call.1} parent=1 // loop_exit
      _
    %381 = vsyncpa [#allocation3], 1
    %s382 = scalar_lea.sflag [#allocation3], 1
    %383 = vsyncpa %s382, 1
    %384 = vsyncpa [#allocation6], 1
    %385 = vsyncpa [#allocation4], 1
    %s386 = scalar_lea.sflag [#allocation4], 1
    %387 = vsyncpa %s386, 1

</llo_original>
